<compile_context>
chip_gen: v7x
topology: tpu7x:2x2x1
jax: 0.10.0
libtpu: 0.0.40
codegen_flags: <defaults>
</compile_context>

<pallas_src>
import jax
import jax.numpy as jnp
from jax.experimental import pallas as pl
from jax.experimental.pallas import tpu as pltpu


# ---------------------------------------------------------------------------
# Kernels
# ---------------------------------------------------------------------------
def _logreg_kernel_lane_dense(x_ref, w_ref, b_ref, o_ref):
    # x_ref: (TILE_B, D) VMEM (streamed); w_ref: (1, D) VMEM (resident, lane-major);
    # b_ref: (1,) SMEM scalar; o_ref: (1, TILE_B) VMEM (lane-dense output row).
    prod = x_ref[...] * w_ref[...]                              # (TILE_B, D)  VPU
    logits = jnp.sum(prod, axis=-1, keepdims=True,
                     dtype=jnp.float32)                         # (TILE_B, 1)  f32 accum
    logits = jnp.transpose(logits, (1, 0)) + b_ref[0]           # (1, TILE_B)  lane-dense
    o_ref[...] = jax.nn.sigmoid(logits).astype(o_ref.dtype)


def _logreg_kernel_column(x_ref, w_ref, b_ref, o_ref):
    # Fallback: identical math, (TILE_B, 1) column output (always lowers).
    prod = x_ref[...] * w_ref[...]
    logits = jnp.sum(prod, axis=-1, keepdims=True, dtype=jnp.float32) + b_ref[0]
    o_ref[...] = jax.nn.sigmoid(logits).astype(o_ref.dtype)


# ---------------------------------------------------------------------------
# Tiling / VMEM sizing
# ---------------------------------------------------------------------------
def _lane_pad(d):
    return ((d + 127) // 128) * 128


def _choose_tile_b(B, D, itemsize, *, lane_dense,
                   target_tile_bytes=4 << 20, vmem_buffer_budget=28 << 20):
    """Bytes-based batch tile: ~target_tile_bytes of x per grid step, bounded by the
    double-buffered VMEM footprint (lane-padded), with >= 2 grid steps when B allows
    (v7x dual TensorCore)."""
    d_pad = _lane_pad(D)
    out_row_bytes = (8 * 4) if lane_dense else (128 * 4)   # per-row VMEM of the out block
    per_row_vmem = 2 * d_pad * itemsize + 2 * out_row_bytes
    cap_vmem = max(8, vmem_buffer_budget // per_row_vmem)
    cap_target = max(8, target_tile_bytes // max(1, D * itemsize))
    tile = min(cap_vmem, cap_target)

    align = 128 if lane_dense else 8
    if B >= 2 * align:                         # guarantee >= 2 grid steps when possible
        tile = min(tile, max(align, (B // 2 // align) * align))
    if tile >= B:
        return B                               # single full-batch block (full-dim blocks are legal)
    return max(align, (tile // align) * align)


def _vmem_limit_bytes(tile_b, D, itemsize, *, lane_dense):
    """Need-based scoped-VMEM limit (+30% headroom), capped at 48 MiB (v7x-safe)."""
    d_pad = _lane_pad(D)
    x_bufs = 2 * tile_b * d_pad * itemsize                       # double-buffered x
    out_bufs = 2 * tile_b * ((8 * 4) if lane_dense else (128 * 4))
    w_buf = 2 * 8 * d_pad * itemsize                             # resident weight
    need = x_bufs + out_bufs + w_buf
    limit = int(need * 1.3) + (2 << 20)
    return int(max(16 << 20, min(48 << 20, limit)))


# ---------------------------------------------------------------------------
# Wrapper
# ---------------------------------------------------------------------------
def _build_call(kernel, B, D, tile_b, x_dtype, *, lane_dense):
    grid = (pl.cdiv(B, tile_b),)
    if lane_dense:
        out_shape = jax.ShapeDtypeStruct((1, B), jnp.float32)
        out_spec = pl.BlockSpec((1, tile_b), lambda i: (0, i))
    else:
        out_shape = jax.ShapeDtypeStruct((B, 1), jnp.float32)
        out_spec = pl.BlockSpec((tile_b, 1), lambda i: (i, 0))

    itemsize = jnp.dtype(x_dtype).itemsize
    cost = pl.CostEstimate(
        flops=2 * B * D,
        transcendentals=B,                                    # one sigmoid/exp per row
        bytes_accessed=B * D * itemsize + D * itemsize + 4 + B * 4,
    )
    return pl.pallas_call(
        kernel,
        out_shape=out_shape,
        grid=grid,
        in_specs=[
            pl.BlockSpec((tile_b, D), lambda i: (i, 0)),                # x: streamed tiles
            pl.BlockSpec((1, D), lambda i: (0, 0)),                     # weight: resident
            pl.BlockSpec(memory_space=pltpu.MemorySpace.SMEM),          # bias scalar
        ],
        out_specs=out_spec,
        compiler_params=pltpu.CompilerParams(
            dimension_semantics=("parallel",),
            vmem_limit_bytes=_vmem_limit_bytes(tile_b, D, itemsize, lane_dense=lane_dense),
        ),
        cost_estimate=cost,
    )


def logistic_regression_forward(x, weight, bias, *, tile_b=None):
    """x: (B, D), weight: (1, D), bias: (1,) -> (B,) float32 = sigmoid(x @ W^T + b)."""
    B, D = x.shape
    w_row = weight.reshape(1, D)   # already lane-major (nn.Linear layout); no transpose
    b1d = bias.reshape(1)
    itemsize = jnp.dtype(x.dtype).itemsize

    # Primary: lane-dense (1, B) output row (unmasked stores, minimal output VMEM).
    try:
        tb = tile_b or _choose_tile_b(B, D, itemsize, lane_dense=True)
        out = _build_call(_logreg_kernel_lane_dense, B, D, tb, x.dtype,
                          lane_dense=True)(x, w_row, b1d)
        return out.reshape(-1)                                 # .view(-1) equivalent
    except Exception:
        # TODO(synk): drop this fallback once the (TILE_B,1)->(1,TILE_B) relayout is
        # confirmed on the deployed Mosaic; the column-output variant is layout-safe.
        tb = tile_b or _choose_tile_b(B, D, itemsize, lane_dense=False)
        out = _build_call(_logreg_kernel_column, B, D, tb, x.dtype,
                          lane_dense=False)(x, w_row, b1d)
        return out.reshape(-1)


def _reference(x, weight, bias):
    return jax.nn.sigmoid(x @ weight.T + bias).reshape(-1)


if __name__ == "__main__":
    key = jax.random.PRNGKey(0)
    B, D = 8, 32  # small shapes: batch=8, input_size=32

    kx, kw, kb = jax.random.split(key, 3)
    x = jax.random.normal(kx, (B, D), dtype=jnp.float32)
    # Deterministic init mimicking nn.Linear(input_size, 1): U(-1/sqrt(D), 1/sqrt(D))
    bound = 1.0 / (D ** 0.5)
    weight = jax.random.uniform(kw, (1, D), jnp.float32, -bound, bound)
    bias = jax.random.uniform(kb, (1,), jnp.float32, -bound, bound)

    y = logistic_regression_forward(x, weight, bias)
    y = jax.block_until_ready(y)

    y_ref = _reference(x, weight, bias)
    assert y.shape == (B,)
    assert jnp.allclose(y, y_ref, atol=1e-6, rtol=1e-6)
    print("KERNEL_OK")
</pallas_src>

<mosaic_0001>
module attributes {stable_mosaic.version = 11 : i64} {
  func.func @_logreg_kernel_lane_dense(%arg0: i32, %arg1: memref<8x32xf32, #tpu.memory_space<vmem>>, %arg2: memref<1x32xf32, #tpu.memory_space<vmem>>, %arg3: memref<1xf32, #tpu.memory_space<smem>>, %arg4: memref<1x8xf32, #tpu.memory_space<vmem>>) attributes {dimension_semantics = [#tpu.dimension_semantics<parallel>], iteration_bounds = array<i64: 1>, scalar_prefetch = 0 : i64, scratch_operands = 0 : i64, tpu.core_type = #tpu.core_type<tc>, window_params = [{transform_indices = @transform_0, window_bounds = array<i64: 8, 32>}, {pipeline_mode = #tpu.pipeline_mode<synchronous>, transform_indices = @transform_1, window_bounds = array<i64: 1, 32>}, {transform_indices = @transform_2, window_bounds = array<i64: 1>}, {transform_indices = @transform_3, window_bounds = array<i64: 1, 8>}]} {
    %c0 = arith.constant 0 : index
    %c0_0 = arith.constant 0 : index
    %0 = vector.load %arg1[%c0, %c0_0] : memref<8x32xf32, #tpu.memory_space<vmem>>, vector<8x32xf32>
    %c0_1 = arith.constant 0 : index
    %c0_2 = arith.constant 0 : index
    %1 = vector.load %arg2[%c0_1, %c0_2] : memref<1x32xf32, #tpu.memory_space<vmem>>, vector<1x32xf32>
    %2 = vector.broadcast %1 : vector<1x32xf32> to vector<8x32xf32>
    %3 = arith.mulf %0, %2 : vector<8x32xf32>
    %cst = arith.constant dense<0.000000e+00> : vector<8xf32>
    %4 = vector.multi_reduction <add>, %3, %cst [1] : vector<8x32xf32> to vector<8xf32>
    %5 = vector.shape_cast %4 : vector<8xf32> to vector<8x1xf32>
    %6 = tpu.transpose %5, [1, 0] : vector<8x1xf32> -> vector<1x8xf32>
    %c0_3 = arith.constant 0 : index
    %7 = memref.load %arg3[%c0_3] : memref<1xf32, #tpu.memory_space<smem>>
    %8 = vector.broadcast %7 : f32 to vector<1x8xf32>
    %9 = arith.addf %6, %8 : vector<1x8xf32>
    %10 = arith.negf %9 : vector<1x8xf32>
    %11 = math.exp %10 : vector<1x8xf32>
    %cst_4 = arith.constant 1.000000e+00 : f32
    %12 = vector.broadcast %cst_4 : f32 to vector<1x8xf32>
    %13 = arith.addf %12, %11 : vector<1x8xf32>
    %14 = arith.divf %12, %13 : vector<1x8xf32>
    %c0_5 = arith.constant 0 : index
    %c0_6 = arith.constant 0 : index
    %15 = vector.load %arg4[%c0_5, %c0_6] : memref<1x8xf32, #tpu.memory_space<vmem>>, vector<1x8xf32>
    tpu.vector_store %arg4[%c0_5, %c0_6], %14 {strides = array<i32>} : memref<1x8xf32, #tpu.memory_space<vmem>>, vector<1x8xf32>,
    return
  }
  func.func @transform_0(%arg0: i32) -> (i32, i32) {
    %c0_i32 = arith.constant 0 : i32
    %c0_i32_0 = arith.constant 0 : i32
    return %arg0, %c0_i32 : i32, i32
  }
  func.func @transform_1(%arg0: i32) -> (i32, i32) {
    %c0_i32 = arith.constant 0 : i32
    %c0_i32_0 = arith.constant 0 : i32
    %c0_i32_1 = arith.constant 0 : i32
    return %c0_i32, %c0_i32_0 : i32, i32
  }
  func.func @transform_2(%arg0: i32) -> i32 {
    %c0_i32 = arith.constant 0 : i32
    %c0_i32_0 = arith.constant 0 : i32
    return %c0_i32 : i32
  }
  func.func @transform_3(%arg0: i32) -> (i32, i32) {
    %c0_i32 = arith.constant 0 : i32
    %c0_i32_0 = arith.constant 0 : i32
    return %c0_i32, %arg0 : i32, i32
  }
}

module attributes {stable_mosaic.version = 11 : i64} {
  func.func @_logreg_kernel_column(%arg0: i32, %arg1: memref<8x32xf32, #tpu.memory_space<vmem>>, %arg2: memref<1x32xf32, #tpu.memory_space<vmem>>, %arg3: memref<1xf32, #tpu.memory_space<smem>>, %arg4: memref<8x1xf32, #tpu.memory_space<vmem>>) attributes {dimension_semantics = [#tpu.dimension_semantics<parallel>], iteration_bounds = array<i64: 1>, scalar_prefetch = 0 : i64, scratch_operands = 0 : i64, tpu.core_type = #tpu.core_type<tc>, window_params = [{transform_indices = @transform_0, window_bounds = array<i64: 8, 32>}, {pipeline_mode = #tpu.pipeline_mode<synchronous>, transform_indices = @transform_1, window_bounds = array<i64: 1, 32>}, {transform_indices = @transform_2, window_bounds = array<i64: 1>}, {transform_indices = @transform_3, window_bounds = array<i64: 8, 1>}]} {
    %c0 = arith.constant 0 : index
    %c0_0 = arith.constant 0 : index
    %0 = vector.load %arg1[%c0, %c0_0] : memref<8x32xf32, #tpu.memory_space<vmem>>, vector<8x32xf32>
    %c0_1 = arith.constant 0 : index
    %c0_2 = arith.constant 0 : index
    %1 = vector.load %arg2[%c0_1, %c0_2] : memref<1x32xf32, #tpu.memory_space<vmem>>, vector<1x32xf32>
    %2 = vector.broadcast %1 : vector<1x32xf32> to vector<8x32xf32>
    %3 = arith.mulf %0, %2 : vector<8x32xf32>
    %cst = arith.constant dense<0.000000e+00> : vector<8xf32>
    %4 = vector.multi_reduction <add>, %3, %cst [1] : vector<8x32xf32> to vector<8xf32>
    %5 = vector.shape_cast %4 : vector<8xf32> to vector<8x1xf32>
    %c0_3 = arith.constant 0 : index
    %6 = memref.load %arg3[%c0_3] : memref<1xf32, #tpu.memory_space<smem>>
    %7 = vector.broadcast %6 : f32 to vector<8x1xf32>
    %8 = arith.addf %5, %7 : vector<8x1xf32>
    %9 = arith.negf %8 : vector<8x1xf32>
    %10 = math.exp %9 : vector<8x1xf32>
    %cst_4 = arith.constant 1.000000e+00 : f32
    %11 = vector.broadcast %cst_4 : f32 to vector<8x1xf32>
    %12 = arith.addf %11, %10 : vector<8x1xf32>
    %13 = arith.divf %11, %12 : vector<8x1xf32>
    %c0_5 = arith.constant 0 : index
    %c0_6 = arith.constant 0 : index
    %14 = vector.load %arg4[%c0_5, %c0_6] : memref<8x1xf32, #tpu.memory_space<vmem>>, vector<8x1xf32>
    tpu.vector_store %arg4[%c0_5, %c0_6], %13 {strides = array<i32>} : memref<8x1xf32, #tpu.memory_space<vmem>>, vector<8x1xf32>,
    return
  }
  func.func @transform_0(%arg0: i32) -> (i32, i32) {
    %c0_i32 = arith.constant 0 : i32
    %c0_i32_0 = arith.constant 0 : i32
    return %arg0, %c0_i32 : i32, i32
  }
  func.func @transform_1(%arg0: i32) -> (i32, i32) {
    %c0_i32 = arith.constant 0 : i32
    %c0_i32_0 = arith.constant 0 : i32
    %c0_i32_1 = arith.constant 0 : i32
    return %c0_i32, %c0_i32_0 : i32, i32
  }
  func.func @transform_2(%arg0: i32) -> i32 {
    %c0_i32 = arith.constant 0 : i32
    %c0_i32_0 = arith.constant 0 : i32
    return %c0_i32 : i32
  }
  func.func @transform_3(%arg0: i32) -> (i32, i32) {
    %c0_i32 = arith.constant 0 : i32
    %c0_i32_0 = arith.constant 0 : i32
    return %arg0, %c0_i32 : i32, i32
  }
}

</mosaic_0001>

<llo_original>
// kernel: tpu_custom_call.1
$region0: #{tpu_custom_call.1}
  #allocation0 [shape = 'u32[]', space=smem, size = 0x4, offset = 0x4, fixed_abs, tag = 'smem constant byte address 0x4 - core index']
  #allocation1 [shape = 'u32[144,128]{1,0:T(1,128)}', space=vmem, size = 0x12000, scoped, tag = 'internal scratch']
  #allocation2 [shape = 'f32[1]{0:T(128)S(6)}', space=smem, size = 0x200, scoped, tag = 'scoped memory for tpu_custom_call.1']
  %s0 = inlined_call_operand.hbm [shape: f32[8,32], index: 0, kind: input, shape index: {}]
  %s1 = inlined_call_operand.vmem [shape: f32[1,32], index: 1, kind: input, shape index: {}]
  %s2 = inlined_call_operand.<no memory space> [shape: f32[1], index: 2, kind: input, shape index: {}]
  %s3 = inlined_call_operand.hbm [shape: f32[1,8], index: 3, kind: output, shape index: {}]
  %s4 = sld [smem:[#allocation0]]
  $region26: #{tpu_custom_call.1} parent=0
    _
  %s6 = ssub.s32 1, %s4
  %s7 = scalar_select 0, %s6, %s4
  %8 = sst [smem:[#allocation2]] %s2
  $region1: #{tpu_custom_call.1} parent=0
    #allocation3 [shape = 'u8[4096]{0}', space=vmem, size = 0x1000, scoped, tag = 'input window, operand 0, single buffered']
    #allocation4 [shape = 's32[1]{0}', space=sflag, size = 0x4, scoped, tag = 'scoped memory for tpu_custom_call.1']
    #allocation5 [shape = 's32[1]{0}', space=sflag, size = 0x4, scoped, tag = 'scoped memory for tpu_custom_call.1']
    #allocation6 [shape = 'u8[512]{0}', space=vmem, size = 0x400, scoped, tag = 'output window, operand 0, single buffered']
    %9 = vsyncpa [#allocation4], 0
    %10 = vsyncpa [#allocation5], 0
    // Predicated region
    $region2: #{tpu_custom_call.1} parent=1 // pred_check
      _
    $region3: #{tpu_custom_call.1} parent=1 // pred_check_branch
      %12 = sbr.rel (0) target = $region5
    $region4: #{tpu_custom_call.1} parent=1 // pred_region
      %s14 = ssub.s32 128, 128
      %15 = vsyncadd [#allocation4], %s14
      %s17 = sshll.u32 [#allocation3], 4
      %s18 = int_to_ptr.vmem [resolvable:$true] %s17
      %20 = dma.hbm_to_vmem [thread:$0]  %s0, 128, %s18, [#allocation4]
    $region5: #{tpu_custom_call.1} parent=1 // pred_fallthru
      _
    // Predicated region
    $region6: #{tpu_custom_call.1} parent=1 // pred_check
      _
    $region7: #{tpu_custom_call.1} parent=1 // pred_check_branch
      %22 = sbr.rel (0) target = $region9
    $region8: #{tpu_custom_call.1} parent=1 // pred_region
      _
    $region9: #{tpu_custom_call.1} parent=1 // pred_fallthru
      _
    // Predicated region
    $region10: #{tpu_custom_call.1} parent=1 // pred_check
      _
    $region11: #{tpu_custom_call.1} parent=1 // pred_check_branch
      %24 = sbr.rel (0) target = $region13
    $region12: #{tpu_custom_call.1} parent=1 // pred_region
      _
    $region13: #{tpu_custom_call.1} parent=1 // pred_fallthru
      _
    // Predicated region
    $region14: #{tpu_custom_call.1} parent=1 // pred_check
      _
    $region15: #{tpu_custom_call.1} parent=1 // pred_check_branch
      %26 = sbr.rel (0) target = $region17
    $region16: #{tpu_custom_call.1} parent=1 // pred_region
      %27 = dma.done [#allocation4], 128
    $region17: #{tpu_custom_call.1} parent=1 // pred_fallthru
      _
    %v28 = vld [vmem:[#allocation3] sm:$0xff]
    %v29 = vld [vmem:[%s1] sm:$0x1]
    %v31 = vlaneseq
    %v32 = vshrl.u32 %v31, 7
    %v33 = vsub.s32 0, %v32
    %v34 = vrot.slane %v29, %v33
    %v36 = vmul.f32 %v28, %v34
    %vm37 = vcmask 261120
    %v38 = vsel %vm37, %v36, 0.0
    %39 = vadd.xlane.f32.xlu0 %v38
    %v40 = vpop.xlane.xlu0 %39
    %41 = vxpose.xlu0.b32.start [1/16] %v40, 128
    %42 = vxpose.xlu0.b32.cont [2/16] 0.0, 128
    %43 = vxpose.xlu0.b32.cont [3/16] 0.0, 128
    %44 = vxpose.xlu0.b32.cont [4/16] 0.0, 128
    %45 = vxpose.xlu0.b32.cont [5/16] 0.0, 128
    %46 = vxpose.xlu0.b32.cont [6/16] 0.0, 128
    %47 = vxpose.xlu0.b32.cont [7/16] 0.0, 128
    %48 = vxpose.xlu0.b32.cont [8/16] 0.0, 128
    %49 = vxpose.xlu0.b32.cont [9/16] 0.0, 128
    %50 = vxpose.xlu0.b32.cont [10/16] 0.0, 128
    %51 = vxpose.xlu0.b32.cont [11/16] 0.0, 128
    %52 = vxpose.xlu0.b32.cont [12/16] 0.0, 128
    %53 = vxpose.xlu0.b32.cont [13/16] 0.0, 128
    %54 = vxpose.xlu0.b32.cont [14/16] 0.0, 128
    %55 = vxpose.xlu0.b32.cont [15/16] 0.0, 128
    %56 = vxpose.xlu0.b32.end [16/16] 0.0, 128
    %v57 = vpop.trf.xlu0
    %v58 = vpop.trf.xlu0
    %v59 = vpop.trf.xlu0
    %v60 = vpop.trf.xlu0
    %v61 = vpop.trf.xlu0
    %v62 = vpop.trf.xlu0
    %v63 = vpop.trf.xlu0
    %v64 = vpop.trf.xlu0
    %v65 = vpop.trf.xlu0
    %v66 = vpop.trf.xlu0
    %v67 = vpop.trf.xlu0
    %v68 = vpop.trf.xlu0
    %v69 = vpop.trf.xlu0
    %v70 = vpop.trf.xlu0
    %v71 = vpop.trf.xlu0
    %v72 = vpop.trf.xlu0
    %s73 = sld [smem:[#allocation2]]
    %v74 = vstv %s73
    %v75 = vadd.f32 %v57, %v74
    %v76 = vxor.u32 %v75, 2147483648
    %v77 = vmul.f32 %v76, 1.442695
    %v78 = vpow.pop %v77
    %v79 = vadd.f32 %v78, 1.0
    %v80 = vrcp.pop %v79
    %v81 = vmul.f32 1.0, %v80
    %vm82 = vcmask 57344
    %83 = vst.msk [vmem:[#allocation6] sm:$0x1] %vm82, %v81
    // Predicated region
    $region18: #{tpu_custom_call.1} parent=1 // pred_check
      _
    $region19: #{tpu_custom_call.1} parent=1 // pred_check_branch
      %85 = sbr.rel (0) target = $region21
    $region20: #{tpu_custom_call.1} parent=1 // pred_region
      %s87 = ssub.s32 16, 16
      %88 = vsyncadd [#allocation5], %s87
      %s90 = sshll.u32 [#allocation6], 4
      %s91 = int_to_ptr.vmem [resolvable:$true] %s90
      %93 = dma.vmem_to_hbm [thread:$0]  %s91, 16, %s3, [#allocation5]
    $region21: #{tpu_custom_call.1} parent=1 // pred_fallthru
      _
    // Predicated region
    $region22: #{tpu_custom_call.1} parent=1 // pred_check
      _
    $region23: #{tpu_custom_call.1} parent=1 // pred_check_branch
      %95 = sbr.rel (0) target = $region25
    $region24: #{tpu_custom_call.1} parent=1 // pred_region
      %96 = dma.done [#allocation5], 16
    $region25: #{tpu_custom_call.1} parent=1 // pred_fallthru
      _
    %97 = vsyncpa [#allocation4], 1
    %98 = vsyncpa [#allocation5], 1

// kernel: tpu_custom_call.1
$region0: #{tpu_custom_call.1}
  #allocation0 [shape = 'u32[]', space=smem, size = 0x4, offset = 0x4, fixed_abs, tag = 'smem constant byte address 0x4 - core index']
  #allocation1 [shape = 'u32[144,128]{1,0:T(1,128)}', space=vmem, size = 0x12000, scoped, tag = 'internal scratch']
  #allocation2 [shape = 'f32[1]{0:T(128)S(6)}', space=smem, size = 0x200, scoped, tag = 'scoped memory for tpu_custom_call.1']
  %s0 = inlined_call_operand.hbm [shape: f32[8,32], index: 0, kind: input, shape index: {}]
  %s1 = inlined_call_operand.vmem [shape: f32[1,32], index: 1, kind: input, shape index: {}]
  %s2 = inlined_call_operand.<no memory space> [shape: f32[1], index: 2, kind: input, shape index: {}]
  %s3 = inlined_call_operand.vmem [shape: f32[8,1], index: 3, kind: output, shape index: {}]
  %s4 = sld [smem:[#allocation0]]
  $region26: #{tpu_custom_call.1} parent=0
    _
  %s6 = ssub.s32 1, %s4
  %s7 = scalar_select 0, %s6, %s4
  %8 = sst [smem:[#allocation2]] %s2
  $region1: #{tpu_custom_call.1} parent=0
    #allocation3 [shape = 'u8[4096]{0}', space=vmem, size = 0x1000, scoped, tag = 'input window, operand 0, single buffered']
    #allocation4 [shape = 's32[1]{0}', space=sflag, size = 0x4, scoped, tag = 'scoped memory for tpu_custom_call.1']
    %9 = vsyncpa [#allocation4], 0
    // Predicated region
    $region2: #{tpu_custom_call.1} parent=1 // pred_check
      _
    $region3: #{tpu_custom_call.1} parent=1 // pred_check_branch
      %11 = sbr.rel (0) target = $region5
    $region4: #{tpu_custom_call.1} parent=1 // pred_region
      %s13 = ssub.s32 128, 128
      %14 = vsyncadd [#allocation4], %s13
      %s16 = sshll.u32 [#allocation3], 4
      %s17 = int_to_ptr.vmem [resolvable:$true] %s16
      %19 = dma.hbm_to_vmem [thread:$0]  %s0, 128, %s17, [#allocation4]
    $region5: #{tpu_custom_call.1} parent=1 // pred_fallthru
      _
    // Predicated region
    $region6: #{tpu_custom_call.1} parent=1 // pred_check
      _
    $region7: #{tpu_custom_call.1} parent=1 // pred_check_branch
      %21 = sbr.rel (0) target = $region9
    $region8: #{tpu_custom_call.1} parent=1 // pred_region
      _
    $region9: #{tpu_custom_call.1} parent=1 // pred_fallthru
      _
    // Predicated region
    $region10: #{tpu_custom_call.1} parent=1 // pred_check
      _
    $region11: #{tpu_custom_call.1} parent=1 // pred_check_branch
      %23 = sbr.rel (0) target = $region13
    $region12: #{tpu_custom_call.1} parent=1 // pred_region
      _
    $region13: #{tpu_custom_call.1} parent=1 // pred_fallthru
      _
    // Predicated region
    $region14: #{tpu_custom_call.1} parent=1 // pred_check
      _
    $region15: #{tpu_custom_call.1} parent=1 // pred_check_branch
      %25 = sbr.rel (0) target = $region17
    $region16: #{tpu_custom_call.1} parent=1 // pred_region
      %26 = dma.done [#allocation4], 128
    $region17: #{tpu_custom_call.1} parent=1 // pred_fallthru
      _
    %v27 = vld [vmem:[#allocation3] sm:$0xff]
    %v28 = vld [vmem:[%s1] sm:$0x1]
    %v30 = vlaneseq
    %v31 = vshrl.u32 %v30, 7
    %v32 = vsub.s32 0, %v31
    %v33 = vrot.slane %v28, %v32
    %v35 = vmul.f32 %v27, %v33
    %vm36 = vcmask 261120
    %v37 = vsel %vm36, %v35, 0.0
    %38 = vadd.xlane.f32.xlu0 %v37
    %v39 = vpop.xlane.xlu0 %38
    %s40 = sld [smem:[#allocation2]]
    %v41 = vstv %s40
    %v42 = vadd.f32 %v39, %v41
    %v43 = vxor.u32 %v42, 2147483648
    %v44 = vmul.f32 %v43, 1.442695
    %v45 = vpow.pop %v44
    %v46 = vadd.f32 %v45, 1.0
    %v47 = vrcp.pop %v46
    %v48 = vmul.f32 1.0, %v47
    %vm49 = vcmask 7168
    %50 = vst.msk [vmem:[%s3] sm:$0xff] %vm49, %v48
    // Predicated region
    $region18: #{tpu_custom_call.1} parent=1 // pred_check
      _
    $region19: #{tpu_custom_call.1} parent=1 // pred_check_branch
      %52 = sbr.rel (0) target = $region21
    $region20: #{tpu_custom_call.1} parent=1 // pred_region
      _
    $region21: #{tpu_custom_call.1} parent=1 // pred_fallthru
      _
    // Predicated region
    $region22: #{tpu_custom_call.1} parent=1 // pred_check
      _
    $region23: #{tpu_custom_call.1} parent=1 // pred_check_branch
      %54 = sbr.rel (0) target = $region25
    $region24: #{tpu_custom_call.1} parent=1 // pred_region
      _
    $region25: #{tpu_custom_call.1} parent=1 // pred_fallthru
      _
    %55 = vsyncpa [#allocation4], 1

</llo_original>
